<compile_context>
chip_gen: v7x
topology: tpu7x:2x2x1
jax: 0.10.0
libtpu: 0.0.40
codegen_flags: <defaults>
</compile_context>

<pallas_src>
import functools
import math
from typing import NamedTuple

import jax
import jax.numpy as jnp
from jax.experimental import pallas as pl
from jax.experimental.pallas import tpu as pltpu


def _round_up(x, m):
    return (x + m - 1) // m * m


def _vmem_info():
    """Returns (physical VMEM bytes, usable budget with ~15% headroom)."""
    cap = 64 * 1024 * 1024
    try:
        info = pltpu.get_tpu_info()
        cap = int(getattr(info, "vmem_capacity_bytes", cap))
    except Exception:
        pass
    return cap, int(cap * 0.85)


def _min_row_tile(itemsize):
    # packed-dtype minimum sublane tile: f32 -> 8, bf16 -> 16, int8/fp8 -> 32
    return {4: 8, 2: 16, 1: 32}.get(itemsize, 8)


class MLPWeights(NamedTuple):
    w12: jax.Array   # [nj, dim_p, 2*th]  fused W1|W2, contiguous hidden slices
    w3: jax.Array    # [nj, th, dim_p]    contiguous hidden slices of W3
    dim: int
    hidden: int
    th: int


def prepare_mlp_weights(w1, w2, w3, *, compute_dtype=jnp.bfloat16, th=None):
    """One-time weight prep (call at model-load time, NOT per forward).

    w1, w2: [dim, hidden]; w3: [hidden, dim]  (y = x @ W convention).
    Casts to compute_dtype, zero-pads to lane-dense shapes, and pre-blocks each
    hidden slice so the kernel's per-step weight DMA is fully contiguous.
    """
    dim, hidden = w1.shape
    dim_p = _round_up(dim, 128)

    if th is None:
        cap, _ = _vmem_info()
        # 512 cuts j-step count on 128-MiB chips (v5e/v6e); 256 keeps the
        # double-buffered weight slabs + a large row tile inside v7x's 64 MiB.
        th = 512 if cap >= 100 * 1024 * 1024 else 256
    th = max(128, min(_round_up(th, 128), _round_up(hidden, 128)))
    hid_p = _round_up(hidden, th)
    nj = hid_p // th

    def pad_cast(w, shape):
        w = w.astype(compute_dtype)
        pads = tuple((0, s - d) for s, d in zip(shape, w.shape))
        if any(p[1] for p in pads):
            w = jnp.pad(w, pads)          # zero pads are mathematically neutral
        return w

    w1c = pad_cast(w1, (dim_p, hid_p))
    w2c = pad_cast(w2, (dim_p, hid_p))
    w3c = pad_cast(w3, (hid_p, dim_p))

    # Block per hidden slice; fuse W1|W2 along the last (lane) axis.
    w1b = w1c.reshape(dim_p, nj, th).transpose(1, 0, 2)   # [nj, dim_p, th]
    w2b = w2c.reshape(dim_p, nj, th).transpose(1, 0, 2)   # [nj, dim_p, th]
    w12 = jnp.concatenate([w1b, w2b], axis=-1)            # [nj, dim_p, 2*th]
    w3b = w3c.reshape(nj, th, dim_p)                       # [nj, th, dim_p]
    return MLPWeights(w12=w12, w3=w3b, dim=dim, hidden=hidden, th=th)


def _mlp_kernel(x_ref, w12_ref, w3_ref, o_ref, acc_ref, *, th):
    # x_ref:   [tm, dim_p]       resident row tile (same block for every j)
    # w12_ref: [dim_p, 2*th]     hidden slice j of fused W1|W2
    # w3_ref:  [th, dim_p]       hidden slice j of W3
    # o_ref:   [tm, dim_p]       written once, on the last hidden step
    # acc_ref: [tm, dim_p] f32   accumulator across the hidden (reduction) axis
    j = pl.program_id(1)
    nj = pl.num_programs(1)

    @pl.when(j == 0)
    def _():
        acc_ref[...] = jnp.zeros_like(acc_ref)

    x = x_ref[...]
    # Single fused MXU stream for W1 and W2, f32 accumulation.
    h = jnp.dot(x, w12_ref[...], preferred_element_type=jnp.float32)  # [tm, 2*th]
    h1 = h[:, :th]
    h2 = h[:, th:]
    # SwiGLU gating in f32; sigmoid goes to the EUP slot (effectively free).
    gated = (h1 * jax.nn.sigmoid(h1)) * h2                             # [tm, th]
    partial_out = jnp.dot(gated.astype(w3_ref.dtype), w3_ref[...],
                          preferred_element_type=jnp.float32)          # [tm, dim_p]

    @pl.when(j < nj - 1)
    def _():
        acc_ref[...] += partial_out

    @pl.when(j == nj - 1)
    def _():
        # Fuse the last partial into the output write: saves one full
        # [tm, dim_p] f32 store + reload per row tile.
        o_ref[...] = (acc_ref[...] + partial_out).astype(o_ref.dtype)


def mlp_pallas(x, weights: MLPWeights, *, tm=None):
    """SwiGLU MLP forward.  x: [..., dim]; weights from prepare_mlp_weights."""
    dim, hidden, th = weights.dim, weights.hidden, weights.th
    nj, dim_p, two_th = weights.w12.shape
    assert two_th == 2 * th
    cdt = weights.w12.dtype
    in_item = jnp.dtype(cdt).itemsize
    out_dtype = x.dtype
    out_item = jnp.dtype(out_dtype).itemsize

    orig_shape = x.shape
    x2d = x.reshape(-1, dim).astype(cdt)
    M = x2d.shape[0]

    cap, budget = _vmem_info()
    min_tm = _min_row_tile(in_item)
    if tm is None:
        # Large row tile -> weights re-streamed fewer times per token;
        # arithmetic intensity ~ tm FLOPs/byte puts v6e/v7x at/above the
        # compute/BW crossover for prefill-sized M.
        tm = 512
    tm = _round_up(max(min_tm, tm), min_tm)
    tm = min(tm, _round_up(M, min_tm))     # shrink M-padding waste for small M

    def est_vmem(tm_):
        w = 2 * (dim_p * 2 * th + th * dim_p) * in_item    # double-buffered W1|W2 + W3
        xb = 2 * tm_ * dim_p * in_item                      # x double buffer
        ob = 2 * tm_ * dim_p * out_item                     # out double buffer
        acc = tm_ * dim_p * 4                               # f32 accumulator
        inter = tm_ * 2 * th * 4 + tm_ * th * 4             # f32 h / gated temps
        return w + xb + ob + acc + inter

    while est_vmem(tm) > budget and tm > min_tm:
        tm = max(min_tm, tm // 2)

    M_p = _round_up(M, tm)
    if (M_p, dim_p) != x2d.shape:
        x2d = jnp.pad(x2d, ((0, M_p - M), (0, dim_p - dim)))

    grid = (M_p // tm, nj)
    n_i = grid[0]
    hid_p = nj * th

    cost = pl.CostEstimate(
        flops=6 * M_p * dim_p * hid_p,                # three matmuls
        transcendentals=M_p * hid_p,                  # sigmoid
        # weights are re-streamed once per row tile; activations once each way
        bytes_accessed=(n_i * (weights.w12.size + weights.w3.size) * in_item
                        + M_p * dim_p * (in_item + out_item)),
    )

    kernel = functools.partial(_mlp_kernel, th=th)

    out = pl.pallas_call(
        kernel,
        out_shape=jax.ShapeDtypeStruct((M_p, dim_p), out_dtype),
        grid_spec=pltpu.PrefetchScalarGridSpec(
            num_scalar_prefetch=0,
            grid=grid,
            in_specs=[
                pl.BlockSpec((tm, dim_p), lambda i, j: (i, 0)),               # x row tile
                pl.BlockSpec((None, dim_p, 2 * th), lambda i, j: (j, 0, 0)),  # W1|W2 slice
                pl.BlockSpec((None, th, dim_p), lambda i, j: (j, 0, 0)),      # W3 slice
            ],
            out_specs=pl.BlockSpec((tm, dim_p), lambda i, j: (i, 0)),
            scratch_shapes=[pltpu.VMEM((tm, dim_p), jnp.float32)],
        ),
        compiler_params=pltpu.CompilerParams(
            dimension_semantics=("parallel", "arbitrary"),
            vmem_limit_bytes=budget,
        ),
        cost_estimate=cost,
    )(x2d, weights.w12, weights.w3)

    return out[:M, :dim].reshape(orig_shape)


def mlp_reference(x, w1, w2, w3):
    hp = jax.lax.Precision.HIGHEST
    h1 = jnp.dot(x, w1, precision=hp)
    h2 = jnp.dot(x, w2, precision=hp)
    return jnp.dot(jax.nn.silu(h1) * h2, w3, precision=hp)


if __name__ == "__main__":
    batch, seq, dim, mult = 2, 8, 32, 4
    hidden = dim * mult

    key = jax.random.PRNGKey(0)
    kx, k1, k2, k3 = jax.random.split(key, 4)

    # Deterministic "Linear(bias=False)"-style init, stored pre-transposed to
    # [in, out] for the kernel's y = x @ W convention.
    x = jax.random.normal(kx, (batch, seq, dim), dtype=jnp.float32)
    b1 = 1.0 / math.sqrt(dim)
    b3 = 1.0 / math.sqrt(hidden)
    w1 = jax.random.uniform(k1, (dim, hidden), jnp.float32, -b1, b1)
    w2 = jax.random.uniform(k2, (dim, hidden), jnp.float32, -b1, b1)
    w3 = jax.random.uniform(k3, (hidden, dim), jnp.float32, -b3, b3)

    ref = mlp_reference(x, w1, w2, w3)

    # f32 compute path (strict-ish correctness check at MXU default precision).
    out_f32 = mlp_pallas(x, prepare_mlp_weights(w1, w2, w3, compute_dtype=jnp.float32))
    jax.block_until_ready(out_f32)
    assert out_f32.shape == (batch, seq, dim)
    assert jnp.allclose(out_f32, ref, atol=2e-3, rtol=2e-3), "f32 mismatch vs reference"

    # Production fast path: bf16 operands + f32 MXU accumulation (default).
    out_bf16 = mlp_pallas(x, prepare_mlp_weights(w1, w2, w3))
    jax.block_until_ready(out_bf16)
    assert out_bf16.shape == (batch, seq, dim)
    assert jnp.allclose(out_bf16.astype(jnp.float32), ref, atol=5e-2, rtol=5e-2), \
        "bf16 mismatch vs reference"

    print("KERNEL_OK")
</pallas_src>

<mosaic_0001>
module attributes {stable_mosaic.version = 11 : i64} {
  func.func @_mlp_kernel(%arg0: i32, %arg1: i32, %arg2: memref<16x128xf32, #tpu.memory_space<vmem>>, %arg3: memref<1x128x256xf32, #tpu.memory_space<vmem>>, %arg4: memref<1x128x128xf32, #tpu.memory_space<vmem>>, %arg5: memref<16x128xf32, #tpu.memory_space<vmem>>, %arg6: memref<16x128xf32, #tpu.memory_space<vmem>>) attributes {dimension_semantics = [#tpu.dimension_semantics<parallel>, #tpu.dimension_semantics<arbitrary>], iteration_bounds = array<i64: 1, 1>, scalar_prefetch = 0 : i64, scratch_operands = 1 : i64, tpu.core_type = #tpu.core_type<tc>, window_params = [{transform_indices = @transform_0, window_bounds = array<i64: 16, 128>}, {transform_indices = @transform_1, window_bounds = array<i64: 1, 128, 256>}, {transform_indices = @transform_2, window_bounds = array<i64: 1, 128, 128>}, {transform_indices = @transform_3, window_bounds = array<i64: 16, 128>}]} {
    %c0_i32 = arith.constant 0 : i32
    %0 = arith.cmpi eq, %arg1, %c0_i32 : i32
    %1 = arith.extui %0 : i1 to i32
    %c0_i32_0 = arith.constant 0 : i32
    %2 = arith.cmpi ne, %1, %c0_i32_0 : i32
    scf.if %2 {
      %cst_14 = arith.constant 0.000000e+00 : f32
      %25 = vector.broadcast %cst_14 : f32 to vector<16x128xf32>
      %c0_15 = arith.constant 0 : index
      %c0_16 = arith.constant 0 : index
      %26 = vector.load %arg6[%c0_15, %c0_16] : memref<16x128xf32, #tpu.memory_space<vmem>>, vector<16x128xf32>
      tpu.vector_store %arg6[%c0_15, %c0_16], %25 {strides = array<i32>} : memref<16x128xf32, #tpu.memory_space<vmem>>, vector<16x128xf32>,
    } else {
    }
    %c0 = arith.constant 0 : index
    %c0_1 = arith.constant 0 : index
    %3 = vector.load %arg2[%c0, %c0_1] : memref<16x128xf32, #tpu.memory_space<vmem>>, vector<16x128xf32>
    %c0_2 = arith.constant 0 : index
    %c0_3 = arith.constant 0 : index
    %c0_4 = arith.constant 0 : index
    %4 = vector.load %arg3[%c0_2, %c0_3, %c0_4] : memref<1x128x256xf32, #tpu.memory_space<vmem>>, vector<1x128x256xf32>
    %5 = vector.shape_cast %4 : vector<1x128x256xf32> to vector<128x256xf32>
    %cst = arith.constant dense<0.000000e+00> : vector<16x256xf32>
    %6 = tpu.matmul %3, %5, %cst {dimension_numbers = #tpu.dot_dimension_numbers<[1], [0], [0], [1], [0, 0, 1, 1], [], []>} : vector<16x128xf32>, vector<128x256xf32>, vector<16x256xf32> -> vector<16x256xf32>
    %7 = vector.extract_strided_slice %6 {offsets = [0, 0], sizes = [16, 128], strides = [1, 1]} : vector<16x256xf32> to vector<16x128xf32>
    %8 = vector.extract_strided_slice %6 {offsets = [0, 128], sizes = [16, 128], strides = [1, 1]} : vector<16x256xf32> to vector<16x128xf32>
    %9 = arith.negf %7 : vector<16x128xf32>
    %10 = math.exp %9 : vector<16x128xf32>
    %cst_5 = arith.constant 1.000000e+00 : f32
    %11 = vector.broadcast %cst_5 : f32 to vector<16x128xf32>
    %12 = arith.addf %11, %10 : vector<16x128xf32>
    %13 = arith.divf %11, %12 : vector<16x128xf32>
    %14 = arith.mulf %7, %13 : vector<16x128xf32>
    %15 = arith.mulf %14, %8 : vector<16x128xf32>
    %c0_6 = arith.constant 0 : index
    %c0_7 = arith.constant 0 : index
    %c0_8 = arith.constant 0 : index
    %16 = vector.load %arg4[%c0_6, %c0_7, %c0_8] : memref<1x128x128xf32, #tpu.memory_space<vmem>>, vector<1x128x128xf32>
    %17 = vector.shape_cast %16 : vector<1x128x128xf32> to vector<128x128xf32>
    %cst_9 = arith.constant dense<0.000000e+00> : vector<16x128xf32>
    %18 = tpu.matmul %15, %17, %cst_9 {dimension_numbers = #tpu.dot_dimension_numbers<[1], [0], [0], [1], [0, 0, 1, 1], [], []>} : vector<16x128xf32>, vector<128x128xf32>, vector<16x128xf32> -> vector<16x128xf32>
    %c0_i32_10 = arith.constant 0 : i32
    %19 = arith.cmpi slt, %arg1, %c0_i32_10 : i32
    %20 = arith.extui %19 : i1 to i32
    %c0_i32_11 = arith.constant 0 : i32
    %21 = arith.cmpi ne, %20, %c0_i32_11 : i32
    scf.if %21 {
      %c0_14 = arith.constant 0 : index
      %c0_15 = arith.constant 0 : index
      %25 = vector.load %arg6[%c0_14, %c0_15] : memref<16x128xf32, #tpu.memory_space<vmem>>, vector<16x128xf32>
      %26 = arith.addf %25, %18 : vector<16x128xf32>
      %c0_16 = arith.constant 0 : index
      %c0_17 = arith.constant 0 : index
      %27 = vector.load %arg6[%c0_16, %c0_17] : memref<16x128xf32, #tpu.memory_space<vmem>>, vector<16x128xf32>
      tpu.vector_store %arg6[%c0_16, %c0_17], %26 {strides = array<i32>} : memref<16x128xf32, #tpu.memory_space<vmem>>, vector<16x128xf32>,
    } else {
    }
    %c0_i32_12 = arith.constant 0 : i32
    %22 = arith.cmpi eq, %arg1, %c0_i32_12 : i32
    %23 = arith.extui %22 : i1 to i32
    %c0_i32_13 = arith.constant 0 : i32
    %24 = arith.cmpi ne, %23, %c0_i32_13 : i32
    scf.if %24 {
      %c0_14 = arith.constant 0 : index
      %c0_15 = arith.constant 0 : index
      %25 = vector.load %arg6[%c0_14, %c0_15] : memref<16x128xf32, #tpu.memory_space<vmem>>, vector<16x128xf32>
      %26 = arith.addf %25, %18 : vector<16x128xf32>
      %c0_16 = arith.constant 0 : index
      %c0_17 = arith.constant 0 : index
      %27 = vector.load %arg5[%c0_16, %c0_17] : memref<16x128xf32, #tpu.memory_space<vmem>>, vector<16x128xf32>
      tpu.vector_store %arg5[%c0_16, %c0_17], %26 {strides = array<i32>} : memref<16x128xf32, #tpu.memory_space<vmem>>, vector<16x128xf32>,
    } else {
    }
    return
  }
  func.func @transform_0(%arg0: i32, %arg1: i32) -> (i32, i32) {
    %c0_i32 = arith.constant 0 : i32
    %c0_i32_0 = arith.constant 0 : i32
    return %arg0, %c0_i32 : i32, i32
  }
  func.func @transform_1(%arg0: i32, %arg1: i32) -> (i32, i32, i32) {
    %c0_i32 = arith.constant 0 : i32
    %c0_i32_0 = arith.constant 0 : i32
    %c0_i32_1 = arith.constant 0 : i32
    return %arg1, %c0_i32, %c0_i32_0 : i32, i32, i32
  }
  func.func @transform_2(%arg0: i32, %arg1: i32) -> (i32, i32, i32) {
    %c0_i32 = arith.constant 0 : i32
    %c0_i32_0 = arith.constant 0 : i32
    %c0_i32_1 = arith.constant 0 : i32
    return %arg1, %c0_i32, %c0_i32_0 : i32, i32, i32
  }
  func.func @transform_3(%arg0: i32, %arg1: i32) -> (i32, i32) {
    %c0_i32 = arith.constant 0 : i32
    %c0_i32_0 = arith.constant 0 : i32
    return %arg0, %c0_i32 : i32, i32
  }
}

</mosaic_0001>

<llo_original>
// kernel: tpu_custom_call.1
$region0: #{tpu_custom_call.1}
  #allocation0 [shape = 'u32[]', space=smem, size = 0x4, offset = 0x4, fixed_abs, tag = 'smem constant byte address 0x4 - core index']
  #allocation1 [shape = 'u32[144,128]{1,0:T(1,128)}', space=vmem, size = 0x12000, scoped, tag = 'internal scratch']
  #allocation2 [shape = 'f32[16,128]{1,0:T(8,128)}', space=vmem, size = 0x2000, scoped, tag = 'scratch operand']
  %s0 = inlined_call_operand.hbm [shape: f32[16,128], index: 0, kind: input, shape index: {}]
  %s1 = inlined_call_operand.hbm [shape: f32[1,128,256], index: 1, kind: input, shape index: {}]
  %s2 = inlined_call_operand.hbm [shape: f32[1,128,128], index: 2, kind: input, shape index: {}]
  %s3 = inlined_call_operand.hbm [shape: f32[16,128], index: 3, kind: output, shape index: {}]
  %s4 = sld [smem:[#allocation0]]
  $region46: #{tpu_custom_call.1} parent=0
    _
  %s6 = ssub.s32 1, %s4
  %s7 = scalar_select 0, %s6, %s4
  $region1: #{tpu_custom_call.1} parent=0
    #allocation3 [shape = 'u8[8192]{0}', space=vmem, size = 0x2000, scoped, tag = 'input window, operand 0, single buffered']
    #allocation4 [shape = 's32[1]{0}', space=sflag, size = 0x4, scoped, tag = 'scoped memory for tpu_custom_call.1']
    #allocation5 [shape = 's32[1]{0}', space=sflag, size = 0x4, scoped, tag = 'scoped memory for tpu_custom_call.1']
    #allocation6 [shape = 'u8[131072]{0}', space=vmem, size = 0x20000, scoped, tag = 'input window, operand 1, single buffered']
    #allocation7 [shape = 's32[1]{0}', space=sflag, size = 0x4, scoped, tag = 'scoped memory for tpu_custom_call.1']
    #allocation8 [shape = 'u8[65536]{0}', space=vmem, size = 0x10000, scoped, tag = 'input window, operand 2, single buffered']
    #allocation9 [shape = 'u8[8192]{0}', space=vmem, size = 0x2000, scoped, tag = 'output window, operand 0, single buffered']
    %8 = vsyncpa [#allocation4], 0
    %9 = vsyncpa [#allocation7], 0
    %10 = vsyncpa [#allocation5], 0
    // Predicated region
    $region2: #{tpu_custom_call.1} parent=1 // pred_check
      _
    $region3: #{tpu_custom_call.1} parent=1 // pred_check_branch
      %12 = sbr.rel (0) target = $region5
    $region4: #{tpu_custom_call.1} parent=1 // pred_region
      %s14 = ssub.s32 256, 256
      %15 = vsyncadd [#allocation4], %s14
      %s16 = sshll.u32 [#allocation3], 4
      %s17 = int_to_ptr.vmem [resolvable:$true] %s16
      %22 = dma.hbm_to_vmem [thread:$0]  %s0, 256, %s17, [#allocation4], 128, 128, 8
    $region5: #{tpu_custom_call.1} parent=1 // pred_fallthru
      _
    // Predicated region
    $region6: #{tpu_custom_call.1} parent=1 // pred_check
      _
    $region7: #{tpu_custom_call.1} parent=1 // pred_check_branch
      %24 = sbr.rel (0) target = $region9
    $region8: #{tpu_custom_call.1} parent=1 // pred_region
      %s26 = ssub.s32 4096, 4096
      %27 = vsyncadd [#allocation7], %s26
      %s28 = sshll.u32 [#allocation6], 4
      %s29 = int_to_ptr.vmem [resolvable:$true] %s28
      %34 = dma.hbm_to_vmem [thread:$0]  %s1, 4096, %s29, [#allocation7], 256, 256, 16
    $region9: #{tpu_custom_call.1} parent=1 // pred_fallthru
      _
    // Predicated region
    $region10: #{tpu_custom_call.1} parent=1 // pred_check
      _
    $region11: #{tpu_custom_call.1} parent=1 // pred_check_branch
      %36 = sbr.rel (0) target = $region13
    $region12: #{tpu_custom_call.1} parent=1 // pred_region
      %s38 = ssub.s32 2048, 2048
      %39 = vsyncadd [#allocation7], %s38
      %s40 = sshll.u32 [#allocation8], 4
      %s41 = int_to_ptr.vmem [resolvable:$true] %s40
      %46 = dma.hbm_to_vmem [thread:$0]  %s2, 2048, %s41, [#allocation7], 128, 128, 8
    $region13: #{tpu_custom_call.1} parent=1 // pred_fallthru
      _
    // Predicated region
    $region14: #{tpu_custom_call.1} parent=1 // pred_check
      _
    $region15: #{tpu_custom_call.1} parent=1 // pred_check_branch
      %48 = sbr.rel (0) target = $region17
    $region16: #{tpu_custom_call.1} parent=1 // pred_region
      %49 = dma.done [#allocation4], 256
    $region17: #{tpu_custom_call.1} parent=1 // pred_fallthru
      _
    // Predicated region
    $region18: #{tpu_custom_call.1} parent=1 // pred_check
      _
    $region19: #{tpu_custom_call.1} parent=1 // pred_check_branch
      %51 = sbr.rel (0) target = $region21
    $region20: #{tpu_custom_call.1} parent=1 // pred_region
      %52 = dma.done [#allocation7], 4096
    $region21: #{tpu_custom_call.1} parent=1 // pred_fallthru
      _
    // Predicated region
    $region22: #{tpu_custom_call.1} parent=1 // pred_check
      _
    $region23: #{tpu_custom_call.1} parent=1 // pred_check_branch
      %54 = sbr.rel (0) target = $region25
    $region24: #{tpu_custom_call.1} parent=1 // pred_region
      %55 = dma.done [#allocation7], 2048
    $region25: #{tpu_custom_call.1} parent=1 // pred_fallthru
      _
    %p56 = scmp.eq.s32.totalorder 0, 0
    // Predicated region
    $region26: #{tpu_custom_call.1} parent=1 // pred_check
      %p57 = pneg %p56
    $region27: #{tpu_custom_call.1} parent=1 // pred_check_branch
      %59 = sbr.rel (%p57) target = $region29
    $region28: #{tpu_custom_call.1} parent=1 // pred_region
      %60 = vst [vmem:[#allocation2] sm:$0xff] 0.0
      %61 = vst [vmem:[#allocation2 + $0x8] sm:$0xff] 0.0
    $region29: #{tpu_custom_call.1} parent=1 // pred_fallthru
      _
    %v62 = vld [vmem:[#allocation3] sm:$0xff]
    %v63 = vld [vmem:[#allocation3 + $0x8] sm:$0xff]
    %v64 = vld [vmem:[#allocation6] sm:$0xff]
    %v65 = vld [vmem:[#allocation6 + $0x8] sm:$0xff]
    %v66 = vld [vmem:[#allocation6 + $0x10] sm:$0xff]
    %v67 = vld [vmem:[#allocation6 + $0x18] sm:$0xff]
    %v68 = vld [vmem:[#allocation6 + $0x20] sm:$0xff]
    %v69 = vld [vmem:[#allocation6 + $0x28] sm:$0xff]
    %v70 = vld [vmem:[#allocation6 + $0x30] sm:$0xff]
    %v71 = vld [vmem:[#allocation6 + $0x38] sm:$0xff]
    %v72 = vld [vmem:[#allocation6 + $0x40] sm:$0xff]
    %v73 = vld [vmem:[#allocation6 + $0x48] sm:$0xff]
    %v74 = vld [vmem:[#allocation6 + $0x50] sm:$0xff]
    %v75 = vld [vmem:[#allocation6 + $0x58] sm:$0xff]
    %v76 = vld [vmem:[#allocation6 + $0x60] sm:$0xff]
    %v77 = vld [vmem:[#allocation6 + $0x68] sm:$0xff]
    %v78 = vld [vmem:[#allocation6 + $0x70] sm:$0xff]
    %v79 = vld [vmem:[#allocation6 + $0x78] sm:$0xff]
    %v80 = vld [vmem:[#allocation6 + $0x80] sm:$0xff]
    %v81 = vld [vmem:[#allocation6 + $0x88] sm:$0xff]
    %v82 = vld [vmem:[#allocation6 + $0x90] sm:$0xff]
    %v83 = vld [vmem:[#allocation6 + $0x98] sm:$0xff]
    %v84 = vld [vmem:[#allocation6 + $0xa0] sm:$0xff]
    %v85 = vld [vmem:[#allocation6 + $0xa8] sm:$0xff]
    %v86 = vld [vmem:[#allocation6 + $0xb0] sm:$0xff]
    %v87 = vld [vmem:[#allocation6 + $0xb8] sm:$0xff]
    %v88 = vld [vmem:[#allocation6 + $0xc0] sm:$0xff]
    %v89 = vld [vmem:[#allocation6 + $0xc8] sm:$0xff]
    %v90 = vld [vmem:[#allocation6 + $0xd0] sm:$0xff]
    %v91 = vld [vmem:[#allocation6 + $0xd8] sm:$0xff]
    %v92 = vld [vmem:[#allocation6 + $0xe0] sm:$0xff]
    %v93 = vld [vmem:[#allocation6 + $0xe8] sm:$0xff]
    %v94 = vld [vmem:[#allocation6 + $0xf0] sm:$0xff]
    %v95 = vld [vmem:[#allocation6 + $0xf8] sm:$0xff]
    %96 = vmatprep.subr.mxu0 %v65
    %97 = vmatpush1.msra.mxu0 %v64
    %98 = vmatprep.subr.mxu0 %v67
    %99 = vmatpush1.msra.mxu0 %v66
    %100 = vmatprep.subr.mxu0 %v69
    %101 = vmatpush1.msra.mxu0 %v68
    %102 = vmatprep.subr.mxu0 %v71
    %103 = vmatpush1.msra.mxu0 %v70
    %104 = vmatprep.subr.mxu0 %v73
    %105 = vmatpush1.msra.mxu0 %v72
    %106 = vmatprep.subr.mxu0 %v75
    %107 = vmatpush1.msra.mxu0 %v74
    %108 = vmatprep.subr.mxu0 %v77
    %109 = vmatpush1.msra.mxu0 %v76
    %110 = vmatprep.subr.mxu0 %v79
    %111 = vmatpush1.msra.mxu0 %v78
    %112 = vmatprep.subr.mxu0 %v81
    %113 = vmatpush1.msra.mxu0 %v80
    %114 = vmatprep.subr.mxu0 %v83
    %115 = vmatpush1.msra.mxu0 %v82
    %116 = vmatprep.subr.mxu0 %v85
    %117 = vmatpush1.msra.mxu0 %v84
    %118 = vmatprep.subr.mxu0 %v87
    %119 = vmatpush1.msra.mxu0 %v86
    %120 = vmatprep.subr.mxu0 %v89
    %121 = vmatpush1.msra.mxu0 %v88
    %122 = vmatprep.subr.mxu0 %v91
    %123 = vmatpush1.msra.mxu0 %v90
    %124 = vmatprep.subr.mxu0 %v93
    %125 = vmatpush1.msra.mxu0 %v92
    %126 = vmatprep.subr.mxu0 %v95
    %127 = vmatpush1.msra.mxu0 %v94
    %128 = vmatprep.subr.mxu0 0.0
    %129 = vmatpush1.msra.mxu0 0.0
    %130 = vmatprep.subr.mxu0 0.0
    %131 = vmatpush1.msra.mxu0 0.0
    %132 = vmatprep.subr.mxu0 0.0
    %133 = vmatpush1.msra.mxu0 0.0
    %134 = vmatprep.subr.mxu0 0.0
    %135 = vmatpush1.msra.mxu0 0.0
    %136 = vmatprep.subr.mxu0 0.0
    %137 = vmatpush1.msra.mxu0 0.0
    %138 = vmatprep.subr.mxu0 0.0
    %139 = vmatpush1.msra.mxu0 0.0
    %140 = vmatprep.subr.mxu0 0.0
    %141 = vmatpush1.msra.mxu0 0.0
    %142 = vmatprep.subr.mxu0 0.0
    %143 = vmatpush1.msra.mxu0 0.0
    %144 = vmatprep.subr.mxu0 0.0
    %145 = vmatpush1.msra.mxu0 0.0
    %146 = vmatprep.subr.mxu0 0.0
    %147 = vmatpush1.msra.mxu0 0.0
    %148 = vmatprep.subr.mxu0 0.0
    %149 = vmatpush1.msra.mxu0 0.0
    %150 = vmatprep.subr.mxu0 0.0
    %151 = vmatpush1.msra.mxu0 0.0
    %152 = vmatprep.subr.mxu0 0.0
    %153 = vmatpush1.msra.mxu0 0.0
    %154 = vmatprep.subr.mxu0 0.0
    %155 = vmatpush1.msra.mxu0 0.0
    %156 = vmatprep.subr.mxu0 0.0
    %157 = vmatpush1.msra.mxu0 0.0
    %158 = vmatprep.subr.mxu0 0.0
    %159 = vmatpush1.msra.mxu0 0.0
    %160 = vmatprep.mubr.f32.mxu0 0.0
    %161 = vmatmul.mubr.f32.gmra.mrb[0].mxu0 %v62
    %v162 = vpop.f32.mrb[0].mxu0
    %v163 = vadd.f32 0.0, %v162
    %v164 = vpop.f32.mrb[0].mxu0
    %v165 = vadd.f32 0.0, %v164
    %166 = vmatprep.mubr.f32.mxu0 0.0
    %167 = vmatmul.mubr.f32.gmra.mrb[0].mxu0 %v63
    %v168 = vpop.f32.mrb[0].mxu0
    %v169 = vadd.f32 0.0, %v168
    %v170 = vpop.f32.mrb[0].mxu0
    %v171 = vadd.f32 0.0, %v170
    %172 = vdwg.mxu0
    %v173 = vxor.u32 %v163, 2147483648
    %v174 = vxor.u32 %v169, 2147483648
    %v175 = vmul.f32 %v173, 1.442695
    %v176 = vpow.pop %v175
    %v177 = vmul.f32 %v174, 1.442695
    %v178 = vpow.pop %v177
    %v179 = vadd.f32 %v176, 1.0
    %v180 = vadd.f32 %v178, 1.0
    %v181 = vrcp.pop %v179
    %v182 = vmul.f32 1.0, %v181
    %v183 = vrcp.pop %v180
    %v184 = vmul.f32 1.0, %v183
    %v185 = vmul.f32 %v163, %v182
    %v186 = vmul.f32 %v169, %v184
    %v187 = vmul.f32 %v185, %v165
    %v188 = vmul.f32 %v186, %v171
    %v189 = vld [vmem:[#allocation8] sm:$0xff]
    %v190 = vld [vmem:[#allocation8 + $0x8] sm:$0xff]
    %v191 = vld [vmem:[#allocation8 + $0x10] sm:$0xff]
    %v192 = vld [vmem:[#allocation8 + $0x18] sm:$0xff]
    %v193 = vld [vmem:[#allocation8 + $0x20] sm:$0xff]
    %v194 = vld [vmem:[#allocation8 + $0x28] sm:$0xff]
    %v195 = vld [vmem:[#allocation8 + $0x30] sm:$0xff]
    %v196 = vld [vmem:[#allocation8 + $0x38] sm:$0xff]
    %v197 = vld [vmem:[#allocation8 + $0x40] sm:$0xff]
    %v198 = vld [vmem:[#allocation8 + $0x48] sm:$0xff]
    %v199 = vld [vmem:[#allocation8 + $0x50] sm:$0xff]
    %v200 = vld [vmem:[#allocation8 + $0x58] sm:$0xff]
    %v201 = vld [vmem:[#allocation8 + $0x60] sm:$0xff]
    %v202 = vld [vmem:[#allocation8 + $0x68] sm:$0xff]
    %v203 = vld [vmem:[#allocation8 + $0x70] sm:$0xff]
    %v204 = vld [vmem:[#allocation8 + $0x78] sm:$0xff]
    %205 = vmatprep.subr.mxu0 0.0
    %206 = vmatpush1.msra.mxu0 %v189
    %207 = vmatprep.subr.mxu0 0.0
    %208 = vmatpush1.msra.mxu0 %v190
    %209 = vmatprep.subr.mxu0 0.0
    %210 = vmatpush1.msra.mxu0 %v191
    %211 = vmatprep.subr.mxu0 0.0
    %212 = vmatpush1.msra.mxu0 %v192
    %213 = vmatprep.subr.mxu0 0.0
    %214 = vmatpush1.msra.mxu0 %v193
    %215 = vmatprep.subr.mxu0 0.0
    %216 = vmatpush1.msra.mxu0 %v194
    %217 = vmatprep.subr.mxu0 0.0
    %218 = vmatpush1.msra.mxu0 %v195
    %219 = vmatprep.subr.mxu0 0.0
    %220 = vmatpush1.msra.mxu0 %v196
    %221 = vmatprep.subr.mxu0 0.0
    %222 = vmatpush1.msra.mxu0 %v197
    %223 = vmatprep.subr.mxu0 0.0
    %224 = vmatpush1.msra.mxu0 %v198
    %225 = vmatprep.subr.mxu0 0.0
    %226 = vmatpush1.msra.mxu0 %v199
    %227 = vmatprep.subr.mxu0 0.0
    %228 = vmatpush1.msra.mxu0 %v200
    %229 = vmatprep.subr.mxu0 0.0
    %230 = vmatpush1.msra.mxu0 %v201
    %231 = vmatprep.subr.mxu0 0.0
    %232 = vmatpush1.msra.mxu0 %v202
    %233 = vmatprep.subr.mxu0 0.0
    %234 = vmatpush1.msra.mxu0 %v203
    %235 = vmatprep.subr.mxu0 0.0
    %236 = vmatpush1.msra.mxu0 %v204
    %237 = vmatprep.subr.mxu0 0.0
    %238 = vmatpush1.msra.mxu0 0.0
    %239 = vmatprep.subr.mxu0 0.0
    %240 = vmatpush1.msra.mxu0 0.0
    %241 = vmatprep.subr.mxu0 0.0
    %242 = vmatpush1.msra.mxu0 0.0
    %243 = vmatprep.subr.mxu0 0.0
    %244 = vmatpush1.msra.mxu0 0.0
    %245 = vmatprep.subr.mxu0 0.0
    %246 = vmatpush1.msra.mxu0 0.0
    %247 = vmatprep.subr.mxu0 0.0
    %248 = vmatpush1.msra.mxu0 0.0
    %249 = vmatprep.subr.mxu0 0.0
    %250 = vmatpush1.msra.mxu0 0.0
    %251 = vmatprep.subr.mxu0 0.0
    %252 = vmatpush1.msra.mxu0 0.0
    %253 = vmatprep.subr.mxu0 0.0
    %254 = vmatpush1.msra.mxu0 0.0
    %255 = vmatprep.subr.mxu0 0.0
    %256 = vmatpush1.msra.mxu0 0.0
    %257 = vmatprep.subr.mxu0 0.0
    %258 = vmatpush1.msra.mxu0 0.0
    %259 = vmatprep.subr.mxu0 0.0
    %260 = vmatpush1.msra.mxu0 0.0
    %261 = vmatprep.subr.mxu0 0.0
    %262 = vmatpush1.msra.mxu0 0.0
    %263 = vmatprep.subr.mxu0 0.0
    %264 = vmatpush1.msra.mxu0 0.0
    %265 = vmatprep.subr.mxu0 0.0
    %266 = vmatpush1.msra.mxu0 0.0
    %267 = vmatprep.subr.mxu0 0.0
    %268 = vmatpush1.msra.mxu0 0.0
    %269 = vmatprep.mubr.f32.mxu0 0.0
    %270 = vmatmul.mubr.f32.gmra.mrb[0].mxu0 %v187
    %v271 = vpop.f32.mrb[0].mxu0
    %v272 = vadd.f32 0.0, %v271
    %v273 = vpop.f32.mrb[0].mxu0
    %274 = vmatprep.mubr.f32.mxu0 0.0
    %275 = vmatmul.mubr.f32.gmra.mrb[0].mxu0 %v188
    %v276 = vpop.f32.mrb[0].mxu0
    %v277 = vadd.f32 0.0, %v276
    %v278 = vpop.f32.mrb[0].mxu0
    %279 = vdwg.mxu0
    %p280 = scmp.lt.s32.totalorder 0, 0
    // Predicated region
    $region30: #{tpu_custom_call.1} parent=1 // pred_check
      %p281 = pneg %p280
    $region31: #{tpu_custom_call.1} parent=1 // pred_check_branch
      %283 = sbr.rel (%p281) target = $region33
    $region32: #{tpu_custom_call.1} parent=1 // pred_region
      %v284 = vld [vmem:[#allocation2] sm:$0xff]
      %v285 = vld [vmem:[#allocation2 + $0x8] sm:$0xff]
      %v286 = vadd.f32 %v284, %v272
      %v287 = vadd.f32 %v285, %v277
      %288 = vst [vmem:[#allocation2] sm:$0xff] %v286
      %289 = vst [vmem:[#allocation2 + $0x8] sm:$0xff] %v287
    $region33: #{tpu_custom_call.1} parent=1 // pred_fallthru
      _
    // Predicated region
    $region34: #{tpu_custom_call.1} parent=1 // pred_check
      %p290 = pneg %p56
    $region35: #{tpu_custom_call.1} parent=1 // pred_check_branch
      %292 = sbr.rel (%p290) target = $region37
    $region36: #{tpu_custom_call.1} parent=1 // pred_region
      %v293 = vld [vmem:[#allocation2] sm:$0xff]
      %v294 = vld [vmem:[#allocation2 + $0x8] sm:$0xff]
      %v295 = vadd.f32 %v293, %v272
      %v296 = vadd.f32 %v294, %v277
      %297 = vst [vmem:[#allocation9] sm:$0xff] %v295
      %298 = vst [vmem:[#allocation9 + $0x8] sm:$0xff] %v296
    $region37: #{tpu_custom_call.1} parent=1 // pred_fallthru
      _
    // Predicated region
    $region38: #{tpu_custom_call.1} parent=1 // pred_check
      _
    $region39: #{tpu_custom_call.1} parent=1 // pred_check_branch
      %300 = sbr.rel (0) target = $region41
    $region40: #{tpu_custom_call.1} parent=1 // pred_region
      %s302 = ssub.s32 256, 256
      %303 = vsyncadd [#allocation5], %s302
      %s304 = sshll.u32 [#allocation9], 4
      %s305 = int_to_ptr.vmem [resolvable:$true] %s304
      %310 = dma.vmem_to_hbm [thread:$0]  %s305, 256, %s3, [#allocation5], 128, 128, 8
    $region41: #{tpu_custom_call.1} parent=1 // pred_fallthru
      _
    // Predicated region
    $region42: #{tpu_custom_call.1} parent=1 // pred_check
      _
    $region43: #{tpu_custom_call.1} parent=1 // pred_check_branch
      %312 = sbr.rel (0) target = $region45
    $region44: #{tpu_custom_call.1} parent=1 // pred_region
      %313 = dma.done [#allocation5], 256
    $region45: #{tpu_custom_call.1} parent=1 // pred_fallthru
      _
    %314 = vsyncpa [#allocation4], 1
    %315 = vsyncpa [#allocation7], 1
    %316 = vsyncpa [#allocation5], 1

</llo_original>
